<compile_context>
chip_gen: v7x
topology: tpu7x:2x2x1
jax: 0.10.0
libtpu: 0.0.40
codegen_flags: <defaults>
</compile_context>

<pallas_src>
import functools
import math

import jax
import jax.numpy as jnp
from jax import lax
from jax.experimental import pallas as pl
from jax.experimental.pallas import tpu as pltpu


def _round_up(x, m):
    return ((x + m - 1) // m) * m


def _sublane_multiple(dtype):
    # Full sublane packing: 8 rows of 32-bit, 16 of bf16, 32 of int8/fp8.
    return 8 * (4 // jnp.dtype(dtype).itemsize)


@functools.lru_cache(maxsize=1)
def _default_vmem_limit_bytes():
    """Generation-aware scoped-VMEM limit: capacity minus 16 MiB headroom."""
    try:
        info = pltpu.get_tpu_info()
        cap = getattr(info, "vmem_capacity_bytes", None)
        if cap is None:
            return 64 * 1024 * 1024
        return max(32 * 1024 * 1024, int(cap) - 16 * 1024 * 1024)
    except Exception:
        return 64 * 1024 * 1024


def _invariant_spec(block_shape, index_map):
    """BlockSpec for a grid-invariant operand: single-buffered (Buffered(1))."""
    try:
        return pl.BlockSpec(block_shape, index_map,
                            pipeline_mode=pl.Buffered(buffer_count=1))
    except Exception:
        # Older JAX without pipeline_mode support: default double-buffering.
        return pl.BlockSpec(block_shape, index_map)


def _apply_act(c, activation):
    if activation == "relu":
        return jnp.maximum(c, 0.0)
    if activation == "gelu":
        return jax.nn.gelu(c)
    if activation == "tanh":
        return jnp.tanh(c)
    if activation == "sigmoid":
        return jax.nn.sigmoid(c)
    if activation == "identity":
        return c
    raise ValueError(f"Unknown activation function: {activation}")


# ----------------------------------------------------------------------------
# Kernels
# ----------------------------------------------------------------------------
def _tied_sae_resident_kernel(x_ref, w_ref, b_ref, xhat_ref, c_ref, *,
                              activation):
    # x_ref : (tb, A_pad)     current batch tile (compute dtype)
    # w_ref : (N_pad, A_pad)  tied dictionary, single VMEM-resident copy
    # b_ref : (1, N_pad)      bias, f32
    x = x_ref[...]
    w = w_ref[...]

    # Encoder: c = x @ W^T (transposed-RHS contraction -> MXU, f32 accumulate).
    c = lax.dot_general(x, w, (((1,), (1,)), ((), ())),
                        preferred_element_type=jnp.float32)
    c = _apply_act(c + b_ref[...], activation)           # f32 epilogue (VPU)
    c_cd = c.astype(c_ref.dtype)                         # compute dtype
    c_ref[...] = c_cd

    # Decoder: x_hat = c @ W (canonical matmul, matched operand dtypes).
    xhat = jnp.dot(c_cd, w, preferred_element_type=jnp.float32)
    xhat_ref[...] = xhat.astype(xhat_ref.dtype)


def _tied_sae_stream_kernel(x_ref, w_ref, b_ref, xhat_ref, c_ref, acc_ref, *,
                            activation):
    # Streams W in (tn, A_pad) tiles along an "arbitrary" grid axis; keeps a
    # f32 x_hat accumulator resident in VMEM scratch.
    j = pl.program_id(1)

    @pl.when(j == 0)
    def _init():
        acc_ref[...] = jnp.zeros_like(acc_ref)

    x = x_ref[...]                                        # (tb, A_pad)
    w = w_ref[...]                                        # (tn, A_pad)

    c = lax.dot_general(x, w, (((1,), (1,)), ((), ())),
                        preferred_element_type=jnp.float32)   # (tb, tn)
    c = _apply_act(c + b_ref[...], activation)
    c_cd = c.astype(c_ref.dtype)
    c_ref[...] = c_cd

    acc_ref[...] += jnp.dot(c_cd, w, preferred_element_type=jnp.float32)

    @pl.when(j == pl.num_programs(1) - 1)
    def _finalize():
        xhat_ref[...] = acc_ref[...].astype(xhat_ref.dtype)


# ----------------------------------------------------------------------------
# Wrappers
# ----------------------------------------------------------------------------
def prepare_tied_sae_params(weights, bias, *, compute_dtype="bfloat16"):
    """Pad/cast the tied dictionary ONCE (hoisted out of the forward call).

    Returns (w_p [N_pad, A_pad], b_p [1, N_pad] f32, (N, A)).
    """
    N, A = weights.shape
    assert bias.shape == (N,)
    cdt = jnp.dtype(compute_dtype)
    A_pad = _round_up(A, 128)
    N_pad = _round_up(N, 128)
    w_p = jnp.pad(jnp.asarray(weights).astype(cdt),
                  ((0, N_pad - N), (0, A_pad - A)))
    b_p = jnp.pad(jnp.asarray(bias).astype(jnp.float32),
                  (0, N_pad - N)).reshape(1, N_pad)
    return w_p, b_p, (N, A)


@functools.partial(
    jax.jit,
    static_argnames=("n_dict_components", "activation_size", "activation",
                     "tb", "n_tile", "vmem_limit_bytes"))
def _tied_sae_forward_impl(x, w_p, b_p, *, n_dict_components, activation_size,
                           activation, tb, n_tile, vmem_limit_bytes):
    B, A = x.shape
    N_pad, A_pad = w_p.shape
    assert A == activation_size
    assert A_pad % 128 == 0 and N_pad % 128 == 0
    assert b_p.shape == (1, N_pad)

    cdt = w_p.dtype
    out_dtype = x.dtype
    csz = jnp.dtype(cdt).itemsize
    osz = jnp.dtype(out_dtype).itemsize

    # Sublane-aware batch tiling (16 for bf16, 8 for f32, 32 for int8/fp8).
    sub = max(_sublane_multiple(cdt), _sublane_multiple(out_dtype))
    tb_eff = min(_round_up(tb, sub), _round_up(B, sub))
    B_pad = _round_up(B, tb_eff)

    x_p = jnp.pad(x.astype(cdt), ((0, B_pad - B), (0, A_pad - A)))

    # Advisory cost estimate for XLA's scheduler around the custom call.
    flops = 4 * B_pad * N_pad * A_pad
    transcendentals = (B_pad * N_pad
                       if activation in ("gelu", "tanh", "sigmoid") else 0)
    bytes_accessed = (B_pad * A_pad * csz       # x in
                      + N_pad * A_pad * csz     # W (read once, resident)
                      + N_pad * 4               # bias
                      + B_pad * A_pad * osz     # x_hat out
                      + B_pad * N_pad * csz)    # c out
    cost = pl.CostEstimate(flops=flops, transcendentals=transcendentals,
                           bytes_accessed=bytes_accessed)

    # Residency budget: single W copy + bias (Buffered(1)) + double-buffered
    # x / x_hat / c tiles + f32 intermediates headroom.
    resident_bytes = (N_pad * A_pad * csz + N_pad * 4
                      + 2 * tb_eff * A_pad * csz
                      + 2 * tb_eff * A_pad * osz
                      + 2 * tb_eff * N_pad * csz
                      + 2 * tb_eff * N_pad * 4)
    use_resident = (n_tile is None
                    and resident_bytes <= int(0.75 * vmem_limit_bytes))

    if use_resident:
        grid = (B_pad // tb_eff,)
        xhat_p, c_p = pl.pallas_call(
            functools.partial(_tied_sae_resident_kernel, activation=activation),
            out_shape=(jax.ShapeDtypeStruct((B_pad, A_pad), out_dtype),
                       jax.ShapeDtypeStruct((B_pad, N_pad), cdt)),
            grid_spec=pltpu.PrefetchScalarGridSpec(
                num_scalar_prefetch=0,
                grid=grid,
                in_specs=[
                    pl.BlockSpec((tb_eff, A_pad), lambda i: (i, 0)),   # x tile
                    _invariant_spec((N_pad, A_pad), lambda i: (0, 0)),  # W
                    _invariant_spec((1, N_pad), lambda i: (0, 0)),      # bias
                ],
                out_specs=[
                    pl.BlockSpec((tb_eff, A_pad), lambda i: (i, 0)),   # x_hat
                    pl.BlockSpec((tb_eff, N_pad), lambda i: (i, 0)),   # c
                ],
            ),
            compiler_params=pltpu.CompilerParams(
                dimension_semantics=("parallel",),     # megacore batch split
                vmem_limit_bytes=vmem_limit_bytes),
            cost_estimate=cost,
        )(x_p, w_p, b_p)
    else:
        # Stream W in (tn, A_pad) tiles along an "arbitrary" axis.
        tn_target = _round_up(n_tile if n_tile is not None else 512, 128)
        tn_eff = 128 * math.gcd(N_pad // 128, tn_target // 128)
        grid = (B_pad // tb_eff, N_pad // tn_eff)
        xhat_p, c_p = pl.pallas_call(
            functools.partial(_tied_sae_stream_kernel, activation=activation),
            out_shape=(jax.ShapeDtypeStruct((B_pad, A_pad), out_dtype),
                       jax.ShapeDtypeStruct((B_pad, N_pad), cdt)),
            grid_spec=pltpu.PrefetchScalarGridSpec(
                num_scalar_prefetch=0,
                grid=grid,
                in_specs=[
                    pl.BlockSpec((tb_eff, A_pad), lambda i, j: (i, 0)),  # x
                    pl.BlockSpec((tn_eff, A_pad), lambda i, j: (j, 0)),  # W tile
                    pl.BlockSpec((1, tn_eff), lambda i, j: (0, j)),      # bias
                ],
                out_specs=[
                    pl.BlockSpec((tb_eff, A_pad), lambda i, j: (i, 0)),  # x_hat
                    pl.BlockSpec((tb_eff, tn_eff), lambda i, j: (i, j)),  # c
                ],
                scratch_shapes=[pltpu.VMEM((tb_eff, A_pad), jnp.float32)],
            ),
            compiler_params=pltpu.CompilerParams(
                dimension_semantics=("parallel", "arbitrary"),
                vmem_limit_bytes=vmem_limit_bytes),
            cost_estimate=cost,
        )(x_p, w_p, b_p)

    return xhat_p[:B, :activation_size], c_p[:B, :n_dict_components]


def tied_sae_forward(x, w_p, b_p, n_dict_components, activation_size, *,
                     activation="relu", tb=256, n_tile=None,
                     vmem_limit_bytes=None):
    """TiedSAE forward on prepared (padded) params. Returns (x_hat, c)."""
    if vmem_limit_bytes is None:
        vmem_limit_bytes = _default_vmem_limit_bytes()
    return _tied_sae_forward_impl(
        x, w_p, b_p,
        n_dict_components=n_dict_components, activation_size=activation_size,
        activation=activation, tb=tb, n_tile=n_tile,
        vmem_limit_bytes=vmem_limit_bytes)


def tied_sae_apply(x, weights, bias, *, compute_dtype="bfloat16", **kwargs):
    """Convenience one-shot entry point matching the PyTorch forward."""
    w_p, b_p, (N, A) = prepare_tied_sae_params(weights, bias,
                                               compute_dtype=compute_dtype)
    return tied_sae_forward(x, w_p, b_p, N, A, **kwargs)


# ----------------------------------------------------------------------------
# Reference & init helpers
# ----------------------------------------------------------------------------
def xavier_uniform(key, shape, dtype=jnp.float32):
    # matches torch.nn.init.xavier_uniform_ for a 2-D (fan_out, fan_in) weight
    fan_out, fan_in = shape
    bound = (6.0 / (fan_in + fan_out)) ** 0.5
    return jax.random.uniform(key, shape, dtype=dtype, minval=-bound, maxval=bound)


def reference_forward(x, weights, bias):
    c = jnp.einsum('ij,bj->bi', weights, x) + bias
    c = jnp.maximum(c, 0.0)
    x_hat = jnp.einsum('ij,bi->bj', weights, c)
    return x_hat, c


if __name__ == "__main__":
    batch = 48
    activation_size = 32
    n_dict_components = 256

    key = jax.random.PRNGKey(0)
    kx, kw = jax.random.split(key)
    x = jax.random.normal(kx, (batch, activation_size), dtype=jnp.float32)
    weights = xavier_uniform(kw, (n_dict_components, activation_size))
    bias = jnp.zeros((n_dict_components,), dtype=jnp.float32)

    x_hat_ref, c_ref = reference_forward(x, weights, bias)

    # 1) Exact-semantics check: f32 operands, VMEM-resident weight path.
    w32, b32, (N, A) = prepare_tied_sae_params(weights, bias,
                                               compute_dtype="float32")
    x_hat, c = tied_sae_forward(x, w32, b32, N, A)
    jax.block_until_ready((x_hat, c))
    assert x_hat.shape == (batch, activation_size)
    assert c.shape == (batch, n_dict_components)
    assert jnp.allclose(x_hat, x_hat_ref, atol=1e-5, rtol=1e-5)
    assert jnp.allclose(c, c_ref, atol=1e-5, rtol=1e-5)

    # 2) Forced N-streaming path (W tiles + f32 x_hat accumulator); multiple
    #    batch tiles (tb=16 -> 3) and dictionary tiles (n_tile=128 -> 2).
    x_hat_s, c_s = tied_sae_forward(x, w32, b32, N, A, tb=16, n_tile=128)
    jax.block_until_ready((x_hat_s, c_s))
    assert jnp.allclose(x_hat_s, x_hat_ref, atol=1e-5, rtol=1e-5)
    assert jnp.allclose(c_s, c_ref, atol=1e-5, rtol=1e-5)

    # 3) Default (perf) path: bf16 operands / f32 MXU accumulation, bf16 c out.
    x_hat_bf, c_bf = tied_sae_apply(x, weights, bias)
    jax.block_until_ready((x_hat_bf, c_bf))
    xb = x.astype(jnp.bfloat16).astype(jnp.float32)
    wb = weights.astype(jnp.bfloat16).astype(jnp.float32)
    x_hat_bref, c_bref = reference_forward(xb, wb, bias)
    assert jnp.allclose(x_hat_bf.astype(jnp.float32), x_hat_bref,
                        atol=7.5e-2, rtol=5e-2)
    assert jnp.allclose(c_bf.astype(jnp.float32), c_bref,
                        atol=7.5e-2, rtol=5e-2)

    print("KERNEL_OK")
</pallas_src>

<mosaic_0001>
module attributes {stable_mosaic.version = 11 : i64} {
  func.func @_tied_sae_resident_kernel(%arg0: i32, %arg1: memref<48x128xf32, #tpu.memory_space<vmem>>, %arg2: memref<256x128xf32, #tpu.memory_space<vmem>>, %arg3: memref<1x256xf32, #tpu.memory_space<vmem>>, %arg4: memref<48x128xf32, #tpu.memory_space<vmem>>, %arg5: memref<48x256xf32, #tpu.memory_space<vmem>>) attributes {dimension_semantics = [#tpu.dimension_semantics<parallel>], iteration_bounds = array<i64: 1>, scalar_prefetch = 0 : i64, scratch_operands = 0 : i64, tpu.core_type = #tpu.core_type<tc>, window_params = [{transform_indices = @transform_0, window_bounds = array<i64: 48, 128>}, {pipeline_mode = #tpu.pipeline_mode<synchronous>, transform_indices = @transform_1, window_bounds = array<i64: 256, 128>}, {pipeline_mode = #tpu.pipeline_mode<synchronous>, transform_indices = @transform_2, window_bounds = array<i64: 1, 256>}, {transform_indices = @transform_3, window_bounds = array<i64: 48, 128>}, {transform_indices = @transform_4, window_bounds = array<i64: 48, 256>}]} {
    %c0 = arith.constant 0 : index
    %c0_0 = arith.constant 0 : index
    %0 = vector.load %arg1[%c0, %c0_0] : memref<48x128xf32, #tpu.memory_space<vmem>>, vector<48x128xf32>
    %c0_1 = arith.constant 0 : index
    %c0_2 = arith.constant 0 : index
    %1 = vector.load %arg2[%c0_1, %c0_2] : memref<256x128xf32, #tpu.memory_space<vmem>>, vector<256x128xf32>
    %cst = arith.constant dense<0.000000e+00> : vector<48x256xf32>
    %2 = tpu.matmul %0, %1, %cst {dimension_numbers = #tpu.dot_dimension_numbers<[1], [1], [0], [0], [0, 0, 1, 0], [], []>} : vector<48x128xf32>, vector<256x128xf32>, vector<48x256xf32> -> vector<48x256xf32>
    %c0_3 = arith.constant 0 : index
    %c0_4 = arith.constant 0 : index
    %3 = vector.load %arg3[%c0_3, %c0_4] : memref<1x256xf32, #tpu.memory_space<vmem>>, vector<1x256xf32>
    %4 = vector.broadcast %3 : vector<1x256xf32> to vector<48x256xf32>
    %5 = arith.addf %2, %4 : vector<48x256xf32>
    %cst_5 = arith.constant 0.000000e+00 : f32
    %6 = vector.broadcast %cst_5 : f32 to vector<48x256xf32>
    %7 = arith.maximumf %5, %6 : vector<48x256xf32>
    %c0_6 = arith.constant 0 : index
    %c0_7 = arith.constant 0 : index
    %8 = vector.load %arg5[%c0_6, %c0_7] : memref<48x256xf32, #tpu.memory_space<vmem>>, vector<48x256xf32>
    tpu.vector_store %arg5[%c0_6, %c0_7], %7 {strides = array<i32>} : memref<48x256xf32, #tpu.memory_space<vmem>>, vector<48x256xf32>,
    %cst_8 = arith.constant dense<0.000000e+00> : vector<48x128xf32>
    %9 = tpu.matmul %7, %1, %cst_8 {dimension_numbers = #tpu.dot_dimension_numbers<[1], [0], [0], [1], [0, 0, 1, 1], [], []>} : vector<48x256xf32>, vector<256x128xf32>, vector<48x128xf32> -> vector<48x128xf32>
    %c0_9 = arith.constant 0 : index
    %c0_10 = arith.constant 0 : index
    %10 = vector.load %arg4[%c0_9, %c0_10] : memref<48x128xf32, #tpu.memory_space<vmem>>, vector<48x128xf32>
    tpu.vector_store %arg4[%c0_9, %c0_10], %9 {strides = array<i32>} : memref<48x128xf32, #tpu.memory_space<vmem>>, vector<48x128xf32>,
    return
  }
  func.func @transform_0(%arg0: i32) -> (i32, i32) {
    %c0_i32 = arith.constant 0 : i32
    %c0_i32_0 = arith.constant 0 : i32
    return %arg0, %c0_i32 : i32, i32
  }
  func.func @transform_1(%arg0: i32) -> (i32, i32) {
    %c0_i32 = arith.constant 0 : i32
    %c0_i32_0 = arith.constant 0 : i32
    %c0_i32_1 = arith.constant 0 : i32
    return %c0_i32, %c0_i32_0 : i32, i32
  }
  func.func @transform_2(%arg0: i32) -> (i32, i32) {
    %c0_i32 = arith.constant 0 : i32
    %c0_i32_0 = arith.constant 0 : i32
    %c0_i32_1 = arith.constant 0 : i32
    return %c0_i32, %c0_i32_0 : i32, i32
  }
  func.func @transform_3(%arg0: i32) -> (i32, i32) {
    %c0_i32 = arith.constant 0 : i32
    %c0_i32_0 = arith.constant 0 : i32
    return %arg0, %c0_i32 : i32, i32
  }
  func.func @transform_4(%arg0: i32) -> (i32, i32) {
    %c0_i32 = arith.constant 0 : i32
    %c0_i32_0 = arith.constant 0 : i32
    return %arg0, %c0_i32 : i32, i32
  }
}

</mosaic_0001>

<llo_original>
// kernel: _tied_sae_forward_impl.1
$region0: #{_tied_sae_forward_impl.1}
  #allocation0 [shape = 'u32[]', space=smem, size = 0x4, offset = 0x4, fixed_abs, tag = 'smem constant byte address 0x4 - core index']
  #allocation1 [shape = 'u32[144,128]{1,0:T(1,128)}', space=vmem, size = 0x12000, scoped, tag = 'internal scratch']
  %s0 = inlined_call_operand.hbm [shape: f32[48,128], index: 0, kind: input, shape index: {}]
  %s1 = inlined_call_operand.hbm [shape: f32[256,128], index: 1, kind: input, shape index: {}]
  %s2 = inlined_call_operand.hbm [shape: f32[1,256], index: 2, kind: input, shape index: {}]
  %s3 = inlined_call_operand.hbm [shape: f32[48,128], index: 3, kind: output, shape index: {0}]
  %s4 = inlined_call_operand.hbm [shape: f32[48,256], index: 4, kind: output, shape index: {1}]
  %5 = xla_tuple %s3, %s4
  %s6 = sld [smem:[#allocation0]]
  $region42: #{_tied_sae_forward_impl.1} parent=0
    _
  %s8 = ssub.s32 1, %s6
  %s9 = scalar_select 0, %s8, %s6
  $region1: #{_tied_sae_forward_impl.1} parent=0
    #allocation2 [shape = 'u8[24576]{0}', space=vmem, size = 0x6000, scoped, tag = 'input window, operand 0, single buffered']
    #allocation3 [shape = 's32[1]{0}', space=sflag, size = 0x4, scoped, tag = 'scoped memory for _tied_sae_forward_impl.1']
    #allocation4 [shape = 's32[1]{0}', space=sflag, size = 0x4, scoped, tag = 'scoped memory for _tied_sae_forward_impl.1']
    #allocation5 [shape = 'u8[131072]{0}', space=vmem, size = 0x20000, scoped, tag = 'input window, operand 1, single buffered']
    #allocation6 [shape = 's32[1]{0}', space=sflag, size = 0x4, scoped, tag = 'scoped memory for _tied_sae_forward_impl.1']
    #allocation7 [shape = 'u8[1024]{0}', space=vmem, size = 0x400, scoped, tag = 'input window, operand 2, single buffered']
    #allocation8 [shape = 'u8[24576]{0}', space=vmem, size = 0x6000, scoped, tag = 'output window, operand 0, single buffered']
    #allocation9 [shape = 'u8[49152]{0}', space=vmem, size = 0xc000, scoped, tag = 'output window, operand 1, single buffered']
    #allocation10 [shape = 's32[1]{0}', space=sflag, size = 0x4, scoped, tag = 'scoped memory for _tied_sae_forward_impl.1']
    %10 = vsyncpa [#allocation3], 0
    %11 = vsyncpa [#allocation6], 0
    %12 = vsyncpa [#allocation4], 0
    %13 = vsyncpa [#allocation10], 0
    // Predicated region
    $region2: #{_tied_sae_forward_impl.1} parent=1 // pred_check
      _
    $region3: #{_tied_sae_forward_impl.1} parent=1 // pred_check_branch
      %15 = sbr.rel (0) target = $region5
    $region4: #{_tied_sae_forward_impl.1} parent=1 // pred_region
      %s17 = ssub.s32 768, 768
      %18 = vsyncadd [#allocation3], %s17
      %s19 = sshll.u32 [#allocation2], 4
      %s20 = int_to_ptr.vmem [resolvable:$true] %s19
      %25 = dma.hbm_to_vmem [thread:$0]  %s0, 768, %s20, [#allocation3], 128, 128, 8
    $region5: #{_tied_sae_forward_impl.1} parent=1 // pred_fallthru
      _
    // Predicated region
    $region6: #{_tied_sae_forward_impl.1} parent=1 // pred_check
      _
    $region7: #{_tied_sae_forward_impl.1} parent=1 // pred_check_branch
      %27 = sbr.rel (0) target = $region9
    $region8: #{_tied_sae_forward_impl.1} parent=1 // pred_region
      %s29 = ssub.s32 4096, 4096
      %30 = vsyncadd [#allocation6], %s29
      %s31 = sshll.u32 [#allocation5], 4
      %s32 = int_to_ptr.vmem [resolvable:$true] %s31
      %37 = dma.hbm_to_vmem [thread:$0]  %s1, 4096, %s32, [#allocation6], 128, 128, 8
    $region9: #{_tied_sae_forward_impl.1} parent=1 // pred_fallthru
      _
    // Predicated region
    $region10: #{_tied_sae_forward_impl.1} parent=1 // pred_check
      _
    $region11: #{_tied_sae_forward_impl.1} parent=1 // pred_check_branch
      %39 = sbr.rel (0) target = $region13
    $region12: #{_tied_sae_forward_impl.1} parent=1 // pred_region
      %s41 = ssub.s32 32, 32
      %42 = vsyncadd [#allocation6], %s41
      %s44 = sshll.u32 [#allocation7], 4
      %s45 = int_to_ptr.vmem [resolvable:$true] %s44
      %47 = dma.hbm_to_vmem [thread:$0]  %s2, 32, %s45, [#allocation6]
    $region13: #{_tied_sae_forward_impl.1} parent=1 // pred_fallthru
      _
    // Predicated region
    $region14: #{_tied_sae_forward_impl.1} parent=1 // pred_check
      _
    $region15: #{_tied_sae_forward_impl.1} parent=1 // pred_check_branch
      %49 = sbr.rel (0) target = $region17
    $region16: #{_tied_sae_forward_impl.1} parent=1 // pred_region
      %50 = dma.done [#allocation3], 768
    $region17: #{_tied_sae_forward_impl.1} parent=1 // pred_fallthru
      _
    // Predicated region
    $region18: #{_tied_sae_forward_impl.1} parent=1 // pred_check
      _
    $region19: #{_tied_sae_forward_impl.1} parent=1 // pred_check_branch
      %52 = sbr.rel (0) target = $region21
    $region20: #{_tied_sae_forward_impl.1} parent=1 // pred_region
      %53 = dma.done [#allocation6], 4096
    $region21: #{_tied_sae_forward_impl.1} parent=1 // pred_fallthru
      _
    // Predicated region
    $region22: #{_tied_sae_forward_impl.1} parent=1 // pred_check
      _
    $region23: #{_tied_sae_forward_impl.1} parent=1 // pred_check_branch
      %55 = sbr.rel (0) target = $region25
    $region24: #{_tied_sae_forward_impl.1} parent=1 // pred_region
      %56 = dma.done [#allocation6], 32
    $region25: #{_tied_sae_forward_impl.1} parent=1 // pred_fallthru
      _
    %v57 = vld [vmem:[#allocation2] sm:$0xff]
    %v58 = vld [vmem:[#allocation2 + $0x8] sm:$0xff]
    %v59 = vld [vmem:[#allocation2 + $0x10] sm:$0xff]
    %v60 = vld [vmem:[#allocation2 + $0x18] sm:$0xff]
    %v61 = vld [vmem:[#allocation2 + $0x20] sm:$0xff]
    %v62 = vld [vmem:[#allocation2 + $0x28] sm:$0xff]
    %v63 = vld [vmem:[#allocation5] sm:$0xff]
    %v64 = vld [vmem:[#allocation5 + $0x8] sm:$0xff]
    %v65 = vld [vmem:[#allocation5 + $0x10] sm:$0xff]
    %v66 = vld [vmem:[#allocation5 + $0x18] sm:$0xff]
    %v67 = vld [vmem:[#allocation5 + $0x20] sm:$0xff]
    %v68 = vld [vmem:[#allocation5 + $0x28] sm:$0xff]
    %v69 = vld [vmem:[#allocation5 + $0x30] sm:$0xff]
    %v70 = vld [vmem:[#allocation5 + $0x38] sm:$0xff]
    %v71 = vld [vmem:[#allocation5 + $0x40] sm:$0xff]
    %v72 = vld [vmem:[#allocation5 + $0x48] sm:$0xff]
    %v73 = vld [vmem:[#allocation5 + $0x50] sm:$0xff]
    %v74 = vld [vmem:[#allocation5 + $0x58] sm:$0xff]
    %v75 = vld [vmem:[#allocation5 + $0x60] sm:$0xff]
    %v76 = vld [vmem:[#allocation5 + $0x68] sm:$0xff]
    %v77 = vld [vmem:[#allocation5 + $0x70] sm:$0xff]
    %v78 = vld [vmem:[#allocation5 + $0x78] sm:$0xff]
    %v79 = vld [vmem:[#allocation5 + $0x80] sm:$0xff]
    %v80 = vld [vmem:[#allocation5 + $0x88] sm:$0xff]
    %v81 = vld [vmem:[#allocation5 + $0x90] sm:$0xff]
    %v82 = vld [vmem:[#allocation5 + $0x98] sm:$0xff]
    %v83 = vld [vmem:[#allocation5 + $0xa0] sm:$0xff]
    %v84 = vld [vmem:[#allocation5 + $0xa8] sm:$0xff]
    %v85 = vld [vmem:[#allocation5 + $0xb0] sm:$0xff]
    %v86 = vld [vmem:[#allocation5 + $0xb8] sm:$0xff]
    %v87 = vld [vmem:[#allocation5 + $0xc0] sm:$0xff]
    %v88 = vld [vmem:[#allocation5 + $0xc8] sm:$0xff]
    %v89 = vld [vmem:[#allocation5 + $0xd0] sm:$0xff]
    %v90 = vld [vmem:[#allocation5 + $0xd8] sm:$0xff]
    %v91 = vld [vmem:[#allocation5 + $0xe0] sm:$0xff]
    %v92 = vld [vmem:[#allocation5 + $0xe8] sm:$0xff]
    %v93 = vld [vmem:[#allocation5 + $0xf0] sm:$0xff]
    %v94 = vld [vmem:[#allocation5 + $0xf8] sm:$0xff]
    %v95 = vld [vmem:[#allocation7] sm:$0x3]
    %v97 = vlaneseq
    %v98 = vshrl.u32 %v97, 7
    %v99 = vsub.s32 0, %v98
    %v100 = vrot.slane %v95, %v99
    %v101 = vlaneseq
    %v102 = vshrl.u32 %v101, 7
    %v103 = vsub.s32 1, %v102
    %v104 = vrot.slane %v95, %v103
    %107 = vmatprep.subr.mxu0 0.0
    %108 = vmatpush1.xpose.msra.mxu0 %v63
    %109 = vmatprep.subr.mxu0 0.0
    %110 = vmatpush1.xpose.msra.mxu0 %v64
    %111 = vmatprep.subr.mxu0 0.0
    %112 = vmatpush1.xpose.msra.mxu0 %v65
    %113 = vmatprep.subr.mxu0 0.0
    %114 = vmatpush1.xpose.msra.mxu0 %v66
    %115 = vmatprep.subr.mxu0 0.0
    %116 = vmatpush1.xpose.msra.mxu0 %v67
    %117 = vmatprep.subr.mxu0 0.0
    %118 = vmatpush1.xpose.msra.mxu0 %v68
    %119 = vmatprep.subr.mxu0 0.0
    %120 = vmatpush1.xpose.msra.mxu0 %v69
    %121 = vmatprep.subr.mxu0 0.0
    %122 = vmatpush1.xpose.msra.mxu0 %v70
    %123 = vmatprep.subr.mxu0 0.0
    %124 = vmatpush1.xpose.msra.mxu0 %v71
    %125 = vmatprep.subr.mxu0 0.0
    %126 = vmatpush1.xpose.msra.mxu0 %v72
    %127 = vmatprep.subr.mxu0 0.0
    %128 = vmatpush1.xpose.msra.mxu0 %v73
    %129 = vmatprep.subr.mxu0 0.0
    %130 = vmatpush1.xpose.msra.mxu0 %v74
    %131 = vmatprep.subr.mxu0 0.0
    %132 = vmatpush1.xpose.msra.mxu0 %v75
    %133 = vmatprep.subr.mxu0 0.0
    %134 = vmatpush1.xpose.msra.mxu0 %v76
    %135 = vmatprep.subr.mxu0 0.0
    %136 = vmatpush1.xpose.msra.mxu0 %v77
    %137 = vmatprep.subr.mxu0 0.0
    %138 = vmatpush1.xpose.msra.mxu0 %v78
    %139 = vmatprep.subr.mxu0 0.0
    %140 = vmatpush1.xpose.msra.mxu0 %v79
    %141 = vmatprep.subr.mxu0 0.0
    %142 = vmatpush1.xpose.msra.mxu0 %v80
    %143 = vmatprep.subr.mxu0 0.0
    %144 = vmatpush1.xpose.msra.mxu0 %v81
    %145 = vmatprep.subr.mxu0 0.0
    %146 = vmatpush1.xpose.msra.mxu0 %v82
    %147 = vmatprep.subr.mxu0 0.0
    %148 = vmatpush1.xpose.msra.mxu0 %v83
    %149 = vmatprep.subr.mxu0 0.0
    %150 = vmatpush1.xpose.msra.mxu0 %v84
    %151 = vmatprep.subr.mxu0 0.0
    %152 = vmatpush1.xpose.msra.mxu0 %v85
    %153 = vmatprep.subr.mxu0 0.0
    %154 = vmatpush1.xpose.msra.mxu0 %v86
    %155 = vmatprep.subr.mxu0 0.0
    %156 = vmatpush1.xpose.msra.mxu0 %v87
    %157 = vmatprep.subr.mxu0 0.0
    %158 = vmatpush1.xpose.msra.mxu0 %v88
    %159 = vmatprep.subr.mxu0 0.0
    %160 = vmatpush1.xpose.msra.mxu0 %v89
    %161 = vmatprep.subr.mxu0 0.0
    %162 = vmatpush1.xpose.msra.mxu0 %v90
    %163 = vmatprep.subr.mxu0 0.0
    %164 = vmatpush1.xpose.msra.mxu0 %v91
    %165 = vmatprep.subr.mxu0 0.0
    %166 = vmatpush1.xpose.msra.mxu0 %v92
    %167 = vmatprep.subr.mxu0 0.0
    %168 = vmatpush1.xpose.msra.mxu0 %v93
    %169 = vmatprep.subr.mxu0 0.0
    %170 = vmatpush1.xpose.msra.mxu0 %v94
    %171 = vmatprep.mubr.f32.mxu0 0.0
    %172 = vmatmul.mubr.f32.gmra.mrb[0].mxu0 %v57
    %v173 = vpop.f32.mrb[0].mxu0
    %v174 = vadd.f32 %v100, %v173
    %v175 = vpop.f32.mrb[0].mxu0
    %v176 = vadd.f32 %v104, %v175
    %177 = vmatprep.mubr.f32.mxu0 0.0
    %178 = vmatmul.mubr.f32.gmra.mrb[0].mxu0 %v58
    %v179 = vpop.f32.mrb[0].mxu0
    %v180 = vadd.f32 %v100, %v179
    %v181 = vpop.f32.mrb[0].mxu0
    %v182 = vadd.f32 %v104, %v181
    %183 = vmatprep.mubr.f32.mxu0 0.0
    %184 = vmatmul.mubr.f32.gmra.mrb[0].mxu0 %v59
    %v185 = vpop.f32.mrb[0].mxu0
    %v186 = vadd.f32 %v100, %v185
    %v187 = vpop.f32.mrb[0].mxu0
    %v188 = vadd.f32 %v104, %v187
    %189 = vmatprep.mubr.f32.mxu0 0.0
    %190 = vmatmul.mubr.f32.gmra.mrb[0].mxu0 %v60
    %v191 = vpop.f32.mrb[0].mxu0
    %v192 = vadd.f32 %v100, %v191
    %v193 = vpop.f32.mrb[0].mxu0
    %v194 = vadd.f32 %v104, %v193
    %195 = vmatprep.mubr.f32.mxu0 0.0
    %196 = vmatmul.mubr.f32.gmra.mrb[0].mxu0 %v61
    %v197 = vpop.f32.mrb[0].mxu0
    %v198 = vadd.f32 %v100, %v197
    %v199 = vpop.f32.mrb[0].mxu0
    %v200 = vadd.f32 %v104, %v199
    %201 = vmatprep.mubr.f32.mxu0 0.0
    %202 = vmatmul.mubr.f32.gmra.mrb[0].mxu0 %v62
    %v203 = vpop.f32.mrb[0].mxu0
    %v204 = vadd.f32 %v100, %v203
    %v205 = vpop.f32.mrb[0].mxu0
    %v206 = vadd.f32 %v104, %v205
    %207 = vdwg.mxu0
    %v208 = vmax.f32 %v174, 0.0
    %v209 = vmax.f32 %v176, 0.0
    %v210 = vmax.f32 %v180, 0.0
    %v211 = vmax.f32 %v182, 0.0
    %v212 = vmax.f32 %v186, 0.0
    %v213 = vmax.f32 %v188, 0.0
    %v214 = vmax.f32 %v192, 0.0
    %v215 = vmax.f32 %v194, 0.0
    %v216 = vmax.f32 %v198, 0.0
    %v217 = vmax.f32 %v200, 0.0
    %v218 = vmax.f32 %v204, 0.0
    %v219 = vmax.f32 %v206, 0.0
    %220 = vst [vmem:[#allocation9] sm:$0xff] %v208
    %221 = vst [vmem:[#allocation9 + $0x8] sm:$0xff] %v209
    %222 = vst [vmem:[#allocation9 + $0x10] sm:$0xff] %v210
    %223 = vst [vmem:[#allocation9 + $0x18] sm:$0xff] %v211
    %224 = vst [vmem:[#allocation9 + $0x20] sm:$0xff] %v212
    %225 = vst [vmem:[#allocation9 + $0x28] sm:$0xff] %v213
    %226 = vst [vmem:[#allocation9 + $0x30] sm:$0xff] %v214
    %227 = vst [vmem:[#allocation9 + $0x38] sm:$0xff] %v215
    %228 = vst [vmem:[#allocation9 + $0x40] sm:$0xff] %v216
    %229 = vst [vmem:[#allocation9 + $0x48] sm:$0xff] %v217
    %230 = vst [vmem:[#allocation9 + $0x50] sm:$0xff] %v218
    %231 = vst [vmem:[#allocation9 + $0x58] sm:$0xff] %v219
    %232 = vmatprep.subr.mxu0 0.0
    %233 = vmatpush1.msra.mxu0 %v63
    %234 = vmatprep.subr.mxu0 0.0
    %235 = vmatpush1.msra.mxu0 %v64
    %236 = vmatprep.subr.mxu0 0.0
    %237 = vmatpush1.msra.mxu0 %v65
    %238 = vmatprep.subr.mxu0 0.0
    %239 = vmatpush1.msra.mxu0 %v66
    %240 = vmatprep.subr.mxu0 0.0
    %241 = vmatpush1.msra.mxu0 %v67
    %242 = vmatprep.subr.mxu0 0.0
    %243 = vmatpush1.msra.mxu0 %v68
    %244 = vmatprep.subr.mxu0 0.0
    %245 = vmatpush1.msra.mxu0 %v69
    %246 = vmatprep.subr.mxu0 0.0
    %247 = vmatpush1.msra.mxu0 %v70
    %248 = vmatprep.subr.mxu0 0.0
    %249 = vmatpush1.msra.mxu0 %v71
    %250 = vmatprep.subr.mxu0 0.0
    %251 = vmatpush1.msra.mxu0 %v72
    %252 = vmatprep.subr.mxu0 0.0
    %253 = vmatpush1.msra.mxu0 %v73
    %254 = vmatprep.subr.mxu0 0.0
    %255 = vmatpush1.msra.mxu0 %v74
    %256 = vmatprep.subr.mxu0 0.0
    %257 = vmatpush1.msra.mxu0 %v75
    %258 = vmatprep.subr.mxu0 0.0
    %259 = vmatpush1.msra.mxu0 %v76
    %260 = vmatprep.subr.mxu0 0.0
    %261 = vmatpush1.msra.mxu0 %v77
    %262 = vmatprep.subr.mxu0 0.0
    %263 = vmatpush1.msra.mxu0 %v78
    %264 = vmatprep.subr.mxu0 0.0
    %265 = vmatpush1.msra.mxu0 %v79
    %266 = vmatprep.subr.mxu0 0.0
    %267 = vmatpush1.msra.mxu0 %v80
    %268 = vmatprep.subr.mxu0 0.0
    %269 = vmatpush1.msra.mxu0 %v81
    %270 = vmatprep.subr.mxu0 0.0
    %271 = vmatpush1.msra.mxu0 %v82
    %272 = vmatprep.subr.mxu0 0.0
    %273 = vmatpush1.msra.mxu0 %v83
    %274 = vmatprep.subr.mxu0 0.0
    %275 = vmatpush1.msra.mxu0 %v84
    %276 = vmatprep.subr.mxu0 0.0
    %277 = vmatpush1.msra.mxu0 %v85
    %278 = vmatprep.subr.mxu0 0.0
    %279 = vmatpush1.msra.mxu0 %v86
    %280 = vmatprep.subr.mxu0 0.0
    %281 = vmatpush1.msra.mxu0 %v87
    %282 = vmatprep.subr.mxu0 0.0
    %283 = vmatpush1.msra.mxu0 %v88
    %284 = vmatprep.subr.mxu0 0.0
    %285 = vmatpush1.msra.mxu0 %v89
    %286 = vmatprep.subr.mxu0 0.0
    %287 = vmatpush1.msra.mxu0 %v90
    %288 = vmatprep.subr.mxu0 0.0
    %289 = vmatpush1.msra.mxu0 %v91
    %290 = vmatprep.subr.mxu0 0.0
    %291 = vmatpush1.msra.mxu0 %v92
    %292 = vmatprep.subr.mxu0 0.0
    %293 = vmatpush1.msra.mxu0 %v93
    %294 = vmatprep.subr.mxu0 0.0
    %295 = vmatpush1.msra.mxu0 %v94
    %296 = vmatprep.mubr.f32.mxu0 %v209
    %297 = vmatmul.mubr.f32.gmra.mrb[0].mxu0 %v208
    %v298 = vpop.f32.mrb[0].mxu0
    %v299 = vadd.f32 0.0, %v298
    %v300 = vpop.f32.mrb[0].mxu0
    %301 = vmatprep.mubr.f32.mxu0 %v211
    %302 = vmatmul.mubr.f32.gmra.mrb[0].mxu0 %v210
    %v303 = vpop.f32.mrb[0].mxu0
    %v304 = vadd.f32 0.0, %v303
    %v305 = vpop.f32.mrb[0].mxu0
    %306 = vmatprep.mubr.f32.mxu0 %v213
    %307 = vmatmul.mubr.f32.gmra.mrb[0].mxu0 %v212
    %v308 = vpop.f32.mrb[0].mxu0
    %v309 = vadd.f32 0.0, %v308
    %v310 = vpop.f32.mrb[0].mxu0
    %311 = vmatprep.mubr.f32.mxu0 %v215
    %312 = vmatmul.mubr.f32.gmra.mrb[0].mxu0 %v214
    %v313 = vpop.f32.mrb[0].mxu0
    %v314 = vadd.f32 0.0, %v313
    %v315 = vpop.f32.mrb[0].mxu0
    %316 = vmatprep.mubr.f32.mxu0 %v217
    %317 = vmatmul.mubr.f32.gmra.mrb[0].mxu0 %v216
    %v318 = vpop.f32.mrb[0].mxu0
    %v319 = vadd.f32 0.0, %v318
    %v320 = vpop.f32.mrb[0].mxu0
    %321 = vmatprep.mubr.f32.mxu0 %v219
    %322 = vmatmul.mubr.f32.gmra.mrb[0].mxu0 %v218
    %v323 = vpop.f32.mrb[0].mxu0
    %v324 = vadd.f32 0.0, %v323
    %v325 = vpop.f32.mrb[0].mxu0
    %326 = vdwg.mxu0
    %327 = vst [vmem:[#allocation8] sm:$0xff] %v299
    %328 = vst [vmem:[#allocation8 + $0x8] sm:$0xff] %v304
    %329 = vst [vmem:[#allocation8 + $0x10] sm:$0xff] %v309
    %330 = vst [vmem:[#allocation8 + $0x18] sm:$0xff] %v314
    %331 = vst [vmem:[#allocation8 + $0x20] sm:$0xff] %v319
    %332 = vst [vmem:[#allocation8 + $0x28] sm:$0xff] %v324
    // Predicated region
    $region26: #{_tied_sae_forward_impl.1} parent=1 // pred_check
      _
    $region27: #{_tied_sae_forward_impl.1} parent=1 // pred_check_branch
      %334 = sbr.rel (0) target = $region29
    $region28: #{_tied_sae_forward_impl.1} parent=1 // pred_region
      %s336 = ssub.s32 768, 768
      %337 = vsyncadd [#allocation4], %s336
      %s338 = sshll.u32 [#allocation8], 4
      %s339 = int_to_ptr.vmem [resolvable:$true] %s338
      %344 = dma.vmem_to_hbm [thread:$0]  %s339, 768, %s3, [#allocation4], 128, 128, 8
    $region29: #{_tied_sae_forward_impl.1} parent=1 // pred_fallthru
      _
    // Predicated region
    $region30: #{_tied_sae_forward_impl.1} parent=1 // pred_check
      _
    $region31: #{_tied_sae_forward_impl.1} parent=1 // pred_check_branch
      %346 = sbr.rel (0) target = $region33
    $region32: #{_tied_sae_forward_impl.1} parent=1 // pred_region
      %s348 = ssub.s32 1536, 1536
      %349 = vsyncadd [#allocation10], %s348
      %s350 = sshll.u32 [#allocation9], 4
      %s351 = int_to_ptr.vmem [resolvable:$true] %s350
      %356 = dma.vmem_to_hbm [thread:$0]  %s351, 1536, %s4, [#allocation10], 256, 256, 16
    $region33: #{_tied_sae_forward_impl.1} parent=1 // pred_fallthru
      _
    // Predicated region
    $region34: #{_tied_sae_forward_impl.1} parent=1 // pred_check
      _
    $region35: #{_tied_sae_forward_impl.1} parent=1 // pred_check_branch
      %358 = sbr.rel (0) target = $region37
    $region36: #{_tied_sae_forward_impl.1} parent=1 // pred_region
      %359 = dma.done [#allocation4], 768
    $region37: #{_tied_sae_forward_impl.1} parent=1 // pred_fallthru
      _
    // Predicated region
    $region38: #{_tied_sae_forward_impl.1} parent=1 // pred_check
      _
    $region39: #{_tied_sae_forward_impl.1} parent=1 // pred_check_branch
      %361 = sbr.rel (0) target = $region41
    $region40: #{_tied_sae_forward_impl.1} parent=1 // pred_region
      %362 = dma.done [#allocation10], 1536
    $region41: #{_tied_sae_forward_impl.1} parent=1 // pred_fallthru
      _
    %363 = vsyncpa [#allocation3], 1
    %364 = vsyncpa [#allocation6], 1
    %365 = vsyncpa [#allocation4], 1
    %366 = vsyncpa [#allocation10], 1

</llo_original>
